<compile_context>
chip_gen: v7x
topology: tpu7x:2x2x1
jax: 0.10.0
libtpu: 0.0.40
codegen_flags: <defaults>
</compile_context>

<pallas_src>
import functools

import jax
import jax.numpy as jnp
from jax import lax
from jax.experimental import pallas as pl
from jax.experimental.pallas import tpu as pltpu

LANE = 128
MIB = 1024 * 1024


def _round_up(x, m):
    return (x + m - 1) // m * m


def _cdiv(a, b):
    return (a + b - 1) // b


def _sublane_for(dtype):
    # 32-bit packs 8 rows / vreg, bf16 packs 16, int8/fp8 pack 32.
    return {4: 8, 2: 16, 1: 32}.get(jnp.dtype(dtype).itemsize, 8)


def _tpu_info():
    """(physical VMEM bytes, scoped-VMEM default bytes, tensorcores per chip).

    Defensive: falls back to conservative defaults if the query fails."""
    kind = ""
    try:
        kind = jax.devices()[0].device_kind.lower()
    except Exception:
        pass
    phys = 128 * MIB
    try:
        phys = int(pltpu.get_tpu_info().vmem_capacity_bytes)
    except Exception:
        if "v7" in kind:
            phys = 64 * MIB
    # v5e's scoped-VMEM default is 16 MiB; v6e/v7x default to 32 MiB.
    is_v5e = ("v5e" in kind) or ("v5 lite" in kind) or ("v5lite" in kind)
    scoped = 16 * MIB if is_v5e else 32 * MIB
    # v7x exposes 2 TensorCores per chip; v4 / v5p megacore also have 2.
    cores = 2 if any(t in kind for t in ("v7", "v4", "v5p")) else 1
    return phys, scoped, cores


def _choose_tk(in_dim_p, out_dim_p, w_item, budget_bytes):
    """Largest K tile whose (double-buffered) weight tile fits the budget.

    in_dim_p is a multiple of 128 (padded at prep time), so tk=128 always
    divides it and the weight tile stays bounded for any in_dim."""
    if in_dim_p * out_dim_p * w_item <= budget_bytes:
        return in_dim_p                      # whole-K, single-buffered weight
    for step in (256, LANE):                 # prefer MXU-friendly 256 multiples
        best = 0
        d = step
        while d < in_dim_p:
            if in_dim_p % d == 0 and 2 * d * out_dim_p * w_item <= budget_bytes:
                best = d
            d += step
        if best:
            return best
    return LANE


# ----------------------------- kernels ------------------------------------


def _ln_relu_epilogue(y, p_ref, o_ref, *, out_dim, eps, padded):
    """y: (tm, out_dim_p) f32 linear output (bias not yet added).

    p_ref rows: 0=bias, 1=gamma, 2=beta, 3=lane mask (f32, zero past out_dim)."""
    bias = p_ref[0:1, :]
    gamma = p_ref[1:2, :]
    beta = p_ref[2:3, :]
    y = y + bias
    inv_n = 1.0 / out_dim
    # Padded feature columns of y are exactly zero (zero weight cols + zero
    # bias), so the row sum over the padded tile equals the true sum.
    mean = jnp.sum(y, axis=-1, keepdims=True) * inv_n
    centered = y - mean
    if padded:
        centered_sq = centered * p_ref[3:4, :]   # precomputed lane mask
    else:
        centered_sq = centered
    var = jnp.sum(centered_sq * centered_sq, axis=-1, keepdims=True) * inv_n
    # Reassociated scale: (centered * rsqrt) * gamma -> centered * (rsqrt*gamma).
    scale = lax.rsqrt(var + eps) * gamma
    y_norm = centered * scale + beta
    # Dropout with the module default p=0.0 is the identity.
    # TODO(synk): wire pltpu.prng_seed + stateful_bernoulli for p>0 training mode.
    o_ref[...] = jnp.maximum(y_norm, 0.0).astype(o_ref.dtype)


def _simple_block_kernel_whole_k(x_ref, w_ref, p_ref, o_ref, *, out_dim, eps,
                                 padded):
    """Whole-K fast path: no accumulator scratch, no zero-init, no RMW."""
    y = jnp.dot(x_ref[...], w_ref[...], preferred_element_type=jnp.float32)
    _ln_relu_epilogue(y, p_ref, o_ref, out_dim=out_dim, eps=eps, padded=padded)


def _simple_block_kernel_multi_k(x_ref, w_ref, p_ref, o_ref, acc_ref, *,
                                 out_dim, eps, padded):
    """K-reduction path with an f32 VMEM accumulator; epilogue on the last K."""
    k = pl.program_id(1)
    part = jnp.dot(x_ref[...], w_ref[...], preferred_element_type=jnp.float32)

    @pl.when(k == 0)
    def _():
        acc_ref[...] = part            # direct store: no zero-init pass

    @pl.when(k > 0)
    def _():
        acc_ref[...] += part

    @pl.when(k == pl.num_programs(1) - 1)
    def _():
        _ln_relu_epilogue(acc_ref[...], p_ref, o_ref,
                          out_dim=out_dim, eps=eps, padded=padded)


# ----------------------------- host wrapper --------------------------------


def prepare_simple_block_params(weight, bias, gamma, beta):
    """One-time parameter prep, hoisted out of the per-call path.

    Transposes the PyTorch [out_dim, in_dim] weight to [in_dim, out_dim],
    zero-pads BOTH axes to multiples of 128, and packs bias/gamma/beta plus a
    lane mask into one (4, out_dim_p) f32 grid-invariant operand."""
    out_dim, in_dim = weight.shape
    out_dim_p = _round_up(out_dim, LANE)
    in_dim_p = _round_up(in_dim, LANE)
    w_t = jnp.pad(jnp.transpose(weight),
                  ((0, in_dim_p - in_dim), (0, out_dim_p - out_dim)))
    pad = out_dim_p - out_dim
    packed = jnp.stack([
        jnp.pad(bias.astype(jnp.float32), (0, pad)),
        jnp.pad(gamma.astype(jnp.float32), (0, pad)),
        jnp.pad(beta.astype(jnp.float32), (0, pad)),
        (jnp.arange(out_dim_p) < out_dim).astype(jnp.float32),
    ], axis=0)
    return w_t, packed


@functools.partial(jax.jit, static_argnames=("out_dim", "tm"))
def simple_block(x, w_t, packed_params, *, out_dim, tm=256):
    """x: [B, in_dim]; (w_t, packed_params) from prepare_simple_block_params."""
    B, in_dim = x.shape
    in_dim_p, out_dim_p = w_t.shape
    assert in_dim <= in_dim_p, "x / weight in_dim mismatch"
    padded = out_dim_p != out_dim

    x_item = jnp.dtype(x.dtype).itemsize
    w_item = jnp.dtype(w_t.dtype).itemsize
    phys_vmem, scoped_default, n_cores = _tpu_info()

    # K tiling: weight-tile budget is generation-aware (tighter on 64 MiB v7x).
    w_budget = 4 * MIB if phys_vmem <= 64 * MIB else 8 * MIB
    tk = _choose_tk(in_dim_p, out_dim_p, w_item, w_budget)
    nk = in_dim_p // tk

    # Pad K of x to match the padded weight (zero columns add zero to the dot).
    if in_dim_p != in_dim:
        x = jnp.pad(x, ((0, 0), (0, in_dim_p - in_dim)))

    # Row tiling: dtype-aware sublane alignment; larger tiles when the weight
    # is re-streamed (nk > 1) to cut weight HBM traffic; never above the batch.
    sub = _sublane_for(x.dtype)
    tm_req = tm if nk == 1 else max(tm, 512)
    tm_eff = max(sub, min(_round_up(tm_req, sub), _round_up(B, sub)))

    def vmem_est(tm_, w_bufs_):
        return (2 * tm_ * tk * x_item                  # x (double-buffered)
                + 2 * tm_ * out_dim_p * x_item         # out (double-buffered)
                + w_bufs_ * tk * out_dim_p * w_item    # weight
                + 4 * out_dim_p * 4                    # packed params (f32)
                + (tm_ * out_dim_p * 4 if nk > 1 else 0)   # f32 accumulator
                + (1 << 20))                           # slack

    w_bufs = 1 if nk == 1 else 2
    # Shrink the row tile if the plan would not fit comfortably in physical VMEM.
    # TODO(synk): for very large out_dim on v7x, a two-pass LayerNorm (accumulate
    # per-row sum/sumsq over N tiles, normalize in a second pass) would avoid
    # holding the whole padded feature row in VMEM.
    while tm_eff > sub and vmem_est(tm_eff, w_bufs) > int(0.70 * phys_vmem):
        tm_eff = max(sub, _round_up(tm_eff // 2, sub))

    # Third weight buffer (smooths DMA jitter) when streamed and headroom allows.
    if nk > 1 and vmem_est(tm_eff, 3) <= int(0.50 * phys_vmem):
        w_bufs = 3

    # On 2-TensorCore chips make the parallel row axis split evenly across cores.
    if n_cores >= 2 and tm_eff > sub:
        if _cdiv(_round_up(B, sub), tm_eff) % 2 == 1:
            tm_half = max(sub, _round_up(tm_eff // 2, sub))
            if _cdiv(_round_up(B, sub), tm_half) % 2 == 0:
                tm_eff = tm_half

    B_pad = _round_up(B, tm_eff)
    if B_pad != B:
        x = jnp.pad(x, ((0, B_pad - B), (0, 0)))
    n_row = B_pad // tm_eff

    est = vmem_est(tm_eff, w_bufs)
    cp_kwargs = dict(
        dimension_semantics=("parallel",) if nk == 1 else ("parallel", "arbitrary"))
    # Raise the scoped VMEM limit only when needed, capped by physical capacity.
    if est > int(0.85 * scoped_default):
        cp_kwargs["vmem_limit_bytes"] = max(
            scoped_default, min(int(est * 3 // 2), int(0.85 * phys_vmem)))

    # Weight is re-streamed once per row tile when nk > 1.
    w_reads = 1 if nk == 1 else n_row
    cost = pl.CostEstimate(
        flops=2 * B_pad * in_dim_p * out_dim_p,
        transcendentals=B_pad,
        bytes_accessed=(B_pad * in_dim_p * x_item
                        + w_reads * in_dim_p * out_dim_p * w_item
                        + 4 * out_dim_p * 4
                        + B_pad * out_dim_p * x_item),
    )

    invariant = pl.Buffered(1)
    if nk == 1:
        kernel = functools.partial(_simple_block_kernel_whole_k,
                                   out_dim=out_dim, eps=1e-5, padded=padded)
        grid = (n_row,)
        in_specs = [
            pl.BlockSpec((tm_eff, in_dim_p), lambda i: (i, 0)),
            pl.BlockSpec((in_dim_p, out_dim_p), lambda i: (0, 0),
                         pipeline_mode=invariant),
            pl.BlockSpec((4, out_dim_p), lambda i: (0, 0),
                         pipeline_mode=invariant),
        ]
        out_specs = pl.BlockSpec((tm_eff, out_dim_p), lambda i: (i, 0))
        scratch_shapes = []
    else:
        kernel = functools.partial(_simple_block_kernel_multi_k,
                                   out_dim=out_dim, eps=1e-5, padded=padded)
        grid = (n_row, nk)
        if w_bufs != 2:
            w_spec = pl.BlockSpec((tk, out_dim_p), lambda i, k: (k, 0),
                                  pipeline_mode=pl.Buffered(w_bufs))
        else:
            w_spec = pl.BlockSpec((tk, out_dim_p), lambda i, k: (k, 0))
        in_specs = [
            pl.BlockSpec((tm_eff, tk), lambda i, k: (i, k)),
            w_spec,
            pl.BlockSpec((4, out_dim_p), lambda i, k: (0, 0),
                         pipeline_mode=invariant),
        ]
        out_specs = pl.BlockSpec((tm_eff, out_dim_p), lambda i, k: (i, 0))
        scratch_shapes = [pltpu.VMEM((tm_eff, out_dim_p), jnp.float32)]

    out_p = pl.pallas_call(
        kernel,
        out_shape=jax.ShapeDtypeStruct((B_pad, out_dim_p), x.dtype),
        grid_spec=pltpu.PrefetchScalarGridSpec(
            num_scalar_prefetch=0,
            grid=grid,
            in_specs=in_specs,
            out_specs=out_specs,
            scratch_shapes=scratch_shapes,
        ),
        compiler_params=pltpu.CompilerParams(**cp_kwargs),
        cost_estimate=cost,
    )(x, w_t, packed_params)

    return out_p[:B, :out_dim]


# ----------------------------- reference & test ----------------------------


def xavier_uniform(key, out_dim, in_dim, dtype=jnp.float32):
    # Matches torch.nn.init.xavier_uniform_ for a [out_dim, in_dim] weight.
    limit = (6.0 / (in_dim + out_dim)) ** 0.5
    return jax.random.uniform(key, (out_dim, in_dim), dtype,
                              minval=-limit, maxval=limit)


def reference_simple_block(x, weight, bias, gamma, beta, eps=1e-5):
    y = x @ weight.T + bias
    mean = jnp.mean(y, axis=-1, keepdims=True)
    var = jnp.mean((y - mean) ** 2, axis=-1, keepdims=True)
    yn = (y - mean) / jnp.sqrt(var + eps)
    return jnp.maximum(yn * gamma + beta, 0.0)


if __name__ == "__main__":
    key = jax.random.PRNGKey(0)
    k_x, k_w = jax.random.split(key)

    batch, in_dim, out_dim = 16, 32, 32

    x = jax.random.normal(k_x, (batch, in_dim), dtype=jnp.float32)
    weight = xavier_uniform(k_w, out_dim, in_dim)      # [out_dim, in_dim]
    bias = jnp.zeros((out_dim,), jnp.float32)          # bias.data.fill_(0.0)
    gamma = jnp.ones((out_dim,), jnp.float32)          # LayerNorm default weight
    beta = jnp.zeros((out_dim,), jnp.float32)          # LayerNorm default bias

    # One-time parameter prep (transpose + lane/K padding + packing).
    w_t, packed = prepare_simple_block_params(weight, bias, gamma, beta)

    out = simple_block(x, w_t, packed, out_dim=out_dim)
    out = jax.block_until_ready(out)

    ref = reference_simple_block(x, weight, bias, gamma, beta)
    assert out.shape == (batch, out_dim)
    assert jnp.allclose(out, ref, atol=1e-4, rtol=1e-4), "mismatch vs reference"

    print("KERNEL_OK")
</pallas_src>

<mosaic_0001>
module attributes {stable_mosaic.version = 11 : i64} {
  func.func @_simple_block_kernel_whole_k(%arg0: i32, %arg1: memref<16x128xf32, #tpu.memory_space<vmem>>, %arg2: memref<128x128xf32, #tpu.memory_space<vmem>>, %arg3: memref<4x128xf32, #tpu.memory_space<vmem>>, %arg4: memref<16x128xf32, #tpu.memory_space<vmem>>) attributes {dimension_semantics = [#tpu.dimension_semantics<parallel>], iteration_bounds = array<i64: 1>, scalar_prefetch = 0 : i64, scratch_operands = 0 : i64, tpu.core_type = #tpu.core_type<tc>, window_params = [{transform_indices = @transform_0, window_bounds = array<i64: 16, 128>}, {pipeline_mode = #tpu.pipeline_mode<synchronous>, transform_indices = @transform_1, window_bounds = array<i64: 128, 128>}, {pipeline_mode = #tpu.pipeline_mode<synchronous>, transform_indices = @transform_2, window_bounds = array<i64: 4, 128>}, {transform_indices = @transform_3, window_bounds = array<i64: 16, 128>}]} {
    %c0 = arith.constant 0 : index
    %c0_0 = arith.constant 0 : index
    %0 = vector.load %arg1[%c0, %c0_0] : memref<16x128xf32, #tpu.memory_space<vmem>>, vector<16x128xf32>
    %c0_1 = arith.constant 0 : index
    %c0_2 = arith.constant 0 : index
    %1 = vector.load %arg2[%c0_1, %c0_2] : memref<128x128xf32, #tpu.memory_space<vmem>>, vector<128x128xf32>
    %cst = arith.constant dense<0.000000e+00> : vector<16x128xf32>
    %2 = tpu.matmul %0, %1, %cst {dimension_numbers = #tpu.dot_dimension_numbers<[1], [0], [0], [1], [0, 0, 1, 1], [], []>} : vector<16x128xf32>, vector<128x128xf32>, vector<16x128xf32> -> vector<16x128xf32>
    %c0_3 = arith.constant 0 : index
    %c0_4 = arith.constant 0 : index
    %3 = vector.load %arg3[%c0_3, %c0_4] : memref<4x128xf32, #tpu.memory_space<vmem>>, vector<1x128xf32>
    %c1 = arith.constant 1 : index
    %c0_5 = arith.constant 0 : index
    %4 = vector.load %arg3[%c1, %c0_5] : memref<4x128xf32, #tpu.memory_space<vmem>>, vector<1x128xf32>
    %c2 = arith.constant 2 : index
    %c0_6 = arith.constant 0 : index
    %5 = vector.load %arg3[%c2, %c0_6] : memref<4x128xf32, #tpu.memory_space<vmem>>, vector<1x128xf32>
    %6 = vector.broadcast %3 : vector<1x128xf32> to vector<16x128xf32>
    %7 = arith.addf %2, %6 : vector<16x128xf32>
    %cst_7 = arith.constant dense<0.000000e+00> : vector<16xf32>
    %8 = vector.multi_reduction <add>, %7, %cst_7 [1] : vector<16x128xf32> to vector<16xf32>
    %9 = vector.shape_cast %8 : vector<16xf32> to vector<16x1xf32>
    %cst_8 = arith.constant 3.125000e-02 : f32
    %10 = vector.broadcast %cst_8 : f32 to vector<16x1xf32>
    %11 = arith.mulf %9, %10 : vector<16x1xf32>
    %12 = vector.broadcast %11 : vector<16x1xf32> to vector<16x128xf32>
    %13 = arith.subf %7, %12 : vector<16x128xf32>
    %c3 = arith.constant 3 : index
    %c0_9 = arith.constant 0 : index
    %14 = vector.load %arg3[%c3, %c0_9] : memref<4x128xf32, #tpu.memory_space<vmem>>, vector<1x128xf32>
    %15 = vector.broadcast %14 : vector<1x128xf32> to vector<16x128xf32>
    %16 = arith.mulf %13, %15 : vector<16x128xf32>
    %17 = arith.mulf %16, %16 : vector<16x128xf32>
    %cst_10 = arith.constant dense<0.000000e+00> : vector<16xf32>
    %18 = vector.multi_reduction <add>, %17, %cst_10 [1] : vector<16x128xf32> to vector<16xf32>
    %19 = vector.shape_cast %18 : vector<16xf32> to vector<16x1xf32>
    %cst_11 = arith.constant 3.125000e-02 : f32
    %20 = vector.broadcast %cst_11 : f32 to vector<16x1xf32>
    %21 = arith.mulf %19, %20 : vector<16x1xf32>
    %cst_12 = arith.constant 9.99999974E-6 : f32
    %22 = vector.broadcast %cst_12 : f32 to vector<16x1xf32>
    %23 = arith.addf %21, %22 : vector<16x1xf32>
    %24 = math.rsqrt %23 : vector<16x1xf32>
    %25 = vector.broadcast %24 : vector<16x1xf32> to vector<16x128xf32>
    %26 = vector.broadcast %4 : vector<1x128xf32> to vector<16x128xf32>
    %27 = arith.mulf %25, %26 : vector<16x128xf32>
    %28 = arith.mulf %13, %27 : vector<16x128xf32>
    %29 = vector.broadcast %5 : vector<1x128xf32> to vector<16x128xf32>
    %30 = arith.addf %28, %29 : vector<16x128xf32>
    %cst_13 = arith.constant 0.000000e+00 : f32
    %31 = vector.broadcast %cst_13 : f32 to vector<16x128xf32>
    %32 = arith.maximumf %30, %31 : vector<16x128xf32>
    %c0_14 = arith.constant 0 : index
    %c0_15 = arith.constant 0 : index
    %33 = vector.load %arg4[%c0_14, %c0_15] : memref<16x128xf32, #tpu.memory_space<vmem>>, vector<16x128xf32>
    tpu.vector_store %arg4[%c0_14, %c0_15], %32 {strides = array<i32>} : memref<16x128xf32, #tpu.memory_space<vmem>>, vector<16x128xf32>,
    return
  }
  func.func @transform_0(%arg0: i32) -> (i32, i32) {
    %c0_i32 = arith.constant 0 : i32
    %c0_i32_0 = arith.constant 0 : i32
    return %arg0, %c0_i32 : i32, i32
  }
  func.func @transform_1(%arg0: i32) -> (i32, i32) {
    %c0_i32 = arith.constant 0 : i32
    %c0_i32_0 = arith.constant 0 : i32
    %c0_i32_1 = arith.constant 0 : i32
    return %c0_i32, %c0_i32_0 : i32, i32
  }
  func.func @transform_2(%arg0: i32) -> (i32, i32) {
    %c0_i32 = arith.constant 0 : i32
    %c0_i32_0 = arith.constant 0 : i32
    %c0_i32_1 = arith.constant 0 : i32
    return %c0_i32, %c0_i32_0 : i32, i32
  }
  func.func @transform_3(%arg0: i32) -> (i32, i32) {
    %c0_i32 = arith.constant 0 : i32
    %c0_i32_0 = arith.constant 0 : i32
    return %arg0, %c0_i32 : i32, i32
  }
}

</mosaic_0001>

<llo_original>
// kernel: simple_block.1
$region0: #{simple_block.1}
  #allocation0 [shape = 'u32[]', space=smem, size = 0x4, offset = 0x4, fixed_abs, tag = 'smem constant byte address 0x4 - core index']
  #allocation1 [shape = 'u32[144,128]{1,0:T(1,128)}', space=vmem, size = 0x12000, scoped, tag = 'internal scratch']
  %s0 = inlined_call_operand.vmem [shape: f32[16,128], index: 0, kind: input, shape index: {}]
  %s1 = inlined_call_operand.hbm [shape: f32[128,128], index: 1, kind: input, shape index: {}]
  %s2 = inlined_call_operand.vmem [shape: f32[4,128], index: 2, kind: input, shape index: {}]
  %s3 = inlined_call_operand.hbm [shape: f32[16,128], index: 3, kind: output, shape index: {}]
  %s4 = sld [smem:[#allocation0]]
  $region26: #{simple_block.1} parent=0
    _
  %s6 = ssub.s32 1, %s4
  %s7 = scalar_select 0, %s6, %s4
  $region1: #{simple_block.1} parent=0
    #allocation2 [shape = 'u8[65536]{0}', space=vmem, size = 0x10000, scoped, tag = 'input window, operand 1, single buffered']
    #allocation3 [shape = 's32[1]{0}', space=sflag, size = 0x4, scoped, tag = 'scoped memory for simple_block.1']
    #allocation4 [shape = 's32[1]{0}', space=sflag, size = 0x4, scoped, tag = 'scoped memory for simple_block.1']
    #allocation5 [shape = 'u8[8192]{0}', space=vmem, size = 0x2000, scoped, tag = 'output window, operand 0, single buffered']
    %8 = vsyncpa [#allocation3], 0
    %9 = vsyncpa [#allocation4], 0
    // Predicated region
    $region2: #{simple_block.1} parent=1 // pred_check
      _
    $region3: #{simple_block.1} parent=1 // pred_check_branch
      %11 = sbr.rel (0) target = $region5
    $region4: #{simple_block.1} parent=1 // pred_region
      _
    $region5: #{simple_block.1} parent=1 // pred_fallthru
      _
    // Predicated region
    $region6: #{simple_block.1} parent=1 // pred_check
      _
    $region7: #{simple_block.1} parent=1 // pred_check_branch
      %13 = sbr.rel (0) target = $region9
    $region8: #{simple_block.1} parent=1 // pred_region
      %s15 = ssub.s32 2048, 2048
      %16 = vsyncadd [#allocation3], %s15
      %s17 = sshll.u32 [#allocation2], 4
      %s18 = int_to_ptr.vmem [resolvable:$true] %s17
      %23 = dma.hbm_to_vmem [thread:$0]  %s1, 2048, %s18, [#allocation3], 128, 128, 8
    $region9: #{simple_block.1} parent=1 // pred_fallthru
      _
    // Predicated region
    $region10: #{simple_block.1} parent=1 // pred_check
      _
    $region11: #{simple_block.1} parent=1 // pred_check_branch
      %25 = sbr.rel (0) target = $region13
    $region12: #{simple_block.1} parent=1 // pred_region
      _
    $region13: #{simple_block.1} parent=1 // pred_fallthru
      _
    // Predicated region
    $region14: #{simple_block.1} parent=1 // pred_check
      _
    $region15: #{simple_block.1} parent=1 // pred_check_branch
      %27 = sbr.rel (0) target = $region17
    $region16: #{simple_block.1} parent=1 // pred_region
      %28 = dma.done [#allocation3], 2048
    $region17: #{simple_block.1} parent=1 // pred_fallthru
      _
    %v29 = vld [vmem:[%s0] sm:$0xff]
    %v30 = vld [vmem:[%s0 + $0x8] sm:$0xff]
    %v31 = vld [vmem:[#allocation2] sm:$0xff]
    %v32 = vld [vmem:[#allocation2 + $0x8] sm:$0xff]
    %v33 = vld [vmem:[#allocation2 + $0x10] sm:$0xff]
    %v34 = vld [vmem:[#allocation2 + $0x18] sm:$0xff]
    %v35 = vld [vmem:[#allocation2 + $0x20] sm:$0xff]
    %v36 = vld [vmem:[#allocation2 + $0x28] sm:$0xff]
    %v37 = vld [vmem:[#allocation2 + $0x30] sm:$0xff]
    %v38 = vld [vmem:[#allocation2 + $0x38] sm:$0xff]
    %v39 = vld [vmem:[#allocation2 + $0x40] sm:$0xff]
    %v40 = vld [vmem:[#allocation2 + $0x48] sm:$0xff]
    %v41 = vld [vmem:[#allocation2 + $0x50] sm:$0xff]
    %v42 = vld [vmem:[#allocation2 + $0x58] sm:$0xff]
    %v43 = vld [vmem:[#allocation2 + $0x60] sm:$0xff]
    %v44 = vld [vmem:[#allocation2 + $0x68] sm:$0xff]
    %v45 = vld [vmem:[#allocation2 + $0x70] sm:$0xff]
    %v46 = vld [vmem:[#allocation2 + $0x78] sm:$0xff]
    %v47 = vld [vmem:[%s2] sm:$0x1]
    %v48 = vld [vmem:[%s2 + $0x1] sm:$0x1]
    %v49 = vld [vmem:[%s2 + $0x2] sm:$0x1]
    %v50 = vlaneseq
    %v51 = vshrl.u32 %v50, 7
    %v52 = vsub.s32 0, %v51
    %v53 = vrot.slane %v47, %v52
    %54 = vmatprep.subr.mxu0 0.0
    %55 = vmatpush1.msra.mxu0 %v31
    %56 = vmatprep.subr.mxu0 0.0
    %57 = vmatpush1.msra.mxu0 %v32
    %58 = vmatprep.subr.mxu0 0.0
    %59 = vmatpush1.msra.mxu0 %v33
    %60 = vmatprep.subr.mxu0 0.0
    %61 = vmatpush1.msra.mxu0 %v34
    %62 = vmatprep.subr.mxu0 0.0
    %63 = vmatpush1.msra.mxu0 %v35
    %64 = vmatprep.subr.mxu0 0.0
    %65 = vmatpush1.msra.mxu0 %v36
    %66 = vmatprep.subr.mxu0 0.0
    %67 = vmatpush1.msra.mxu0 %v37
    %68 = vmatprep.subr.mxu0 0.0
    %69 = vmatpush1.msra.mxu0 %v38
    %70 = vmatprep.subr.mxu0 0.0
    %71 = vmatpush1.msra.mxu0 %v39
    %72 = vmatprep.subr.mxu0 0.0
    %73 = vmatpush1.msra.mxu0 %v40
    %74 = vmatprep.subr.mxu0 0.0
    %75 = vmatpush1.msra.mxu0 %v41
    %76 = vmatprep.subr.mxu0 0.0
    %77 = vmatpush1.msra.mxu0 %v42
    %78 = vmatprep.subr.mxu0 0.0
    %79 = vmatpush1.msra.mxu0 %v43
    %80 = vmatprep.subr.mxu0 0.0
    %81 = vmatpush1.msra.mxu0 %v44
    %82 = vmatprep.subr.mxu0 0.0
    %83 = vmatpush1.msra.mxu0 %v45
    %84 = vmatprep.subr.mxu0 0.0
    %85 = vmatpush1.msra.mxu0 %v46
    %86 = vmatprep.subr.mxu0 0.0
    %87 = vmatpush1.msra.mxu0 0.0
    %88 = vmatprep.subr.mxu0 0.0
    %89 = vmatpush1.msra.mxu0 0.0
    %90 = vmatprep.subr.mxu0 0.0
    %91 = vmatpush1.msra.mxu0 0.0
    %92 = vmatprep.subr.mxu0 0.0
    %93 = vmatpush1.msra.mxu0 0.0
    %94 = vmatprep.subr.mxu0 0.0
    %95 = vmatpush1.msra.mxu0 0.0
    %96 = vmatprep.subr.mxu0 0.0
    %97 = vmatpush1.msra.mxu0 0.0
    %98 = vmatprep.subr.mxu0 0.0
    %99 = vmatpush1.msra.mxu0 0.0
    %100 = vmatprep.subr.mxu0 0.0
    %101 = vmatpush1.msra.mxu0 0.0
    %102 = vmatprep.subr.mxu0 0.0
    %103 = vmatpush1.msra.mxu0 0.0
    %104 = vmatprep.subr.mxu0 0.0
    %105 = vmatpush1.msra.mxu0 0.0
    %106 = vmatprep.subr.mxu0 0.0
    %107 = vmatpush1.msra.mxu0 0.0
    %108 = vmatprep.subr.mxu0 0.0
    %109 = vmatpush1.msra.mxu0 0.0
    %110 = vmatprep.subr.mxu0 0.0
    %111 = vmatpush1.msra.mxu0 0.0
    %112 = vmatprep.subr.mxu0 0.0
    %113 = vmatpush1.msra.mxu0 0.0
    %114 = vmatprep.subr.mxu0 0.0
    %115 = vmatpush1.msra.mxu0 0.0
    %116 = vmatprep.subr.mxu0 0.0
    %117 = vmatpush1.msra.mxu0 0.0
    %118 = vmatprep.mubr.f32.mxu0 0.0
    %119 = vmatmul.mubr.f32.gmra.mrb[0].mxu0 %v29
    %v120 = vpop.f32.mrb[0].mxu0
    %v121 = vadd.f32 %v53, %v120
    %v122 = vpop.f32.mrb[0].mxu0
    %123 = vmatprep.mubr.f32.mxu0 0.0
    %124 = vmatmul.mubr.f32.gmra.mrb[0].mxu0 %v30
    %v125 = vpop.f32.mrb[0].mxu0
    %v126 = vadd.f32 %v53, %v125
    %v127 = vpop.f32.mrb[0].mxu0
    %128 = vdwg.mxu0
    %129 = vadd.xlane.f32.xlu0 %v121
    %v130 = vpop.xlane.xlu0 %129
    %131 = vadd.xlane.f32.xlu0 %v126
    %v132 = vpop.xlane.xlu0 %131
    %v133 = vmul.f32 %v130, 0.03125
    %v134 = vmul.f32 %v132, 0.03125
    %v135 = vsub.f32 %v121, %v133
    %v136 = vsub.f32 %v126, %v134
    %v137 = vld [vmem:[%s2 + $0x3] sm:$0x1]
    %v138 = vlaneseq
    %v139 = vshrl.u32 %v138, 7
    %v140 = vsub.s32 0, %v139
    %v141 = vrot.slane %v137, %v140
    %v142 = vmul.f32 %v135, %v141
    %v143 = vmul.f32 %v136, %v141
    %v144 = vmul.f32 %v142, %v142
    %v145 = vmul.f32 %v143, %v143
    %146 = vadd.xlane.f32.xlu0 %v144
    %v147 = vpop.xlane.xlu0 %146
    %148 = vadd.xlane.f32.xlu0 %v145
    %v149 = vpop.xlane.xlu0 %148
    %v150 = vmul.f32 %v147, 0.03125
    %v151 = vmul.f32 %v149, 0.03125
    %v152 = vadd.f32 %v150, 1e-05
    %v153 = vadd.f32 %v151, 1e-05
    %v154 = vrsqrt.pop %v152
    %v155 = vrsqrt.pop %v153
    %v156 = vlaneseq
    %v157 = vshrl.u32 %v156, 7
    %v158 = vsub.s32 0, %v157
    %v159 = vrot.slane %v48, %v158
    %v160 = vmul.f32 %v154, %v159
    %v161 = vmul.f32 %v155, %v159
    %v162 = vmul.f32 %v135, %v160
    %v163 = vmul.f32 %v136, %v161
    %v164 = vlaneseq
    %v165 = vshrl.u32 %v164, 7
    %v166 = vsub.s32 0, %v165
    %v167 = vrot.slane %v49, %v166
    %v168 = vadd.f32 %v162, %v167
    %v169 = vadd.f32 %v163, %v167
    %v170 = vmax.f32 %v168, 0.0
    %v171 = vmax.f32 %v169, 0.0
    %172 = vst [vmem:[#allocation5] sm:$0xff] %v170
    %173 = vst [vmem:[#allocation5 + $0x8] sm:$0xff] %v171
    // Predicated region
    $region18: #{simple_block.1} parent=1 // pred_check
      _
    $region19: #{simple_block.1} parent=1 // pred_check_branch
      %175 = sbr.rel (0) target = $region21
    $region20: #{simple_block.1} parent=1 // pred_region
      %s177 = ssub.s32 256, 256
      %178 = vsyncadd [#allocation4], %s177
      %s179 = sshll.u32 [#allocation5], 4
      %s180 = int_to_ptr.vmem [resolvable:$true] %s179
      %185 = dma.vmem_to_hbm [thread:$0]  %s180, 256, %s3, [#allocation4], 128, 128, 8
    $region21: #{simple_block.1} parent=1 // pred_fallthru
      _
    // Predicated region
    $region22: #{simple_block.1} parent=1 // pred_check
      _
    $region23: #{simple_block.1} parent=1 // pred_check_branch
      %187 = sbr.rel (0) target = $region25
    $region24: #{simple_block.1} parent=1 // pred_region
      %188 = dma.done [#allocation4], 256
    $region25: #{simple_block.1} parent=1 // pred_fallthru
      _
    %189 = vsyncpa [#allocation3], 1
    %190 = vsyncpa [#allocation4], 1

</llo_original>
